<compile_context>
chip_gen: v7x
topology: tpu7x:2x2x1
jax: 0.10.0
libtpu: 0.0.40
codegen_flags: <defaults>
</compile_context>

<pallas_src>
import functools

import jax
import jax.numpy as jnp
from jax.experimental import pallas as pl
from jax.experimental.pallas import tpu as pltpu


@functools.lru_cache(maxsize=None)
def _num_tensorcores():
    """Best-effort TensorCore count (v7x has 2 per chip); falls back to 1."""
    try:
        info = pltpu.get_tpu_info()
        for name in ("num_cores", "core_count", "num_tensorcores", "tensorcores"):
            v = getattr(info, name, None)
            if isinstance(v, int) and v > 0:
                return v
    except Exception:
        pass
    return 1


def _make_kernel(ngroups):
    """One MXU matmul + bias + keep-mask per row tile.

    ngroups == 1 : x (tm, K)   @ w (K, H)     -> (tm, H);   keep (tm, 1) broadcasts.
    ngroups == P : x (tm, P*K) @ w (P*K, P*H) -> (tm, P*H)  lane-dense tile;
                   keep (tm, P) expanded to P*H lanes via a tiny 0/1 dot.
    """
    def kernel(x_ref, w_ref, b_ref, keep_ref, e_ref, o_ref):
        y = jnp.dot(x_ref[...], w_ref[...], preferred_element_type=jnp.float32)
        if ngroups == 1:
            keep_w = keep_ref[...]                      # (tm, 1) broadcast over H lanes
        else:
            keep_w = jnp.dot(keep_ref[...], e_ref[...],
                             preferred_element_type=jnp.float32)
        # keep == 0 zeroes the whole token including the bias (matches reference).
        o_ref[...] = ((y + b_ref[...]) * keep_w).astype(o_ref.dtype)
    return kernel


def prepare_kpts_linproj_params(weight, bias):
    """Pre-transpose / block-diagonalise nn.Linear params once; reuse across calls."""
    weight = jnp.asarray(weight, jnp.float32)            # (H, K) PyTorch layout
    bias = jnp.asarray(bias, jnp.float32)                 # (H,)
    H, K = weight.shape
    wt = weight.T                                          # (K, H)
    P = 128 // H if (H < 128 and 128 % H == 0) else 1      # tokens per lane-dense row
    params = {
        "K": K, "H": H, "P": P,
        "w": wt,                                           # (K, H)
        "b": bias.reshape(1, H),                           # (1, H)
        "e": jnp.ones((1, H), jnp.float32),                # unused in the P == 1 kernel
    }
    if P > 1:
        eye = jnp.eye(P, dtype=jnp.float32)
        params["w_bd"] = jnp.kron(eye, wt)                              # (P*K, P*H) block-diag
        params["b_bd"] = jnp.tile(bias, P).reshape(1, P * H)            # (1, P*H)
        params["e_bd"] = jnp.kron(eye, jnp.ones((1, H), jnp.float32))   # (P, P*H) keep expander
    return params


def keypoints_lin_proj(keypoints_xyc, feats_masks, drop_kps, weight, bias,
                       use_conf=True, tm_tokens=4096, prepared=None):
    """
    keypoints_xyc : (B, N, 17, 3) float32
    feats_masks   : (B, N) bool
    drop_kps      : (B, N, 1) float32 (1.0 -> zero that token)
    weight        : (hidden_dim, in_features) float32 (nn.Linear layout)
    bias          : (hidden_dim,) float32
    returns       : (B, N, hidden_dim) float32
    """
    B, N = feats_masks.shape
    feats = keypoints_xyc if use_conf else keypoints_xyc[..., :2]
    x = feats.reshape(B * N, -1).astype(jnp.float32)       # (M, K)
    M, K = x.shape

    if prepared is None:
        prepared = prepare_kpts_linproj_params(weight, bias)
    H = prepared["H"]
    assert prepared["K"] == K, "weight in_features mismatch with keypoint features"

    # Fused keep mask: token kept iff feats_mask and drop_kps != 1 (exact equality
    # on purpose to match the reference's `drop_kps == 1` zeroing).
    keep = jnp.logical_and(
        feats_masks.reshape(M),
        drop_kps.reshape(M) != 1.0,
    ).astype(jnp.float32)

    # Pack P tokens per row when possible so the output tile is lane-dense
    # (P*H == 128) and the reshapes below are free (row-major contiguous).
    P = prepared["P"]
    if P > 1 and (M % P != 0 or M // P < 8):
        P = 1
    if P > 1:
        rows, cin, cout = M // P, P * K, P * H
        x2, keep2 = x.reshape(rows, cin), keep.reshape(rows, P)
        w, b, e = prepared["w_bd"], prepared["b_bd"], prepared["e_bd"]
    else:
        rows, cin, cout = M, K, H
        x2, keep2 = x, keep.reshape(rows, 1)
        w, b, e = prepared["w"], prepared["b"], prepared["e"]

    # Row tile: big tiles amortize the ~0.35us/step overhead; no wrapper-side
    # padding -- Pallas masks the tail block's out-of-bounds writes.
    tile = max(1, tm_tokens // P)
    if tile >= rows:
        tile = rows                                    # single full block
    else:
        tile = max(8, (tile // 8) * 8)                 # sublane multiple of 8
    steps = pl.cdiv(rows, tile)

    # Give every TensorCore work on multi-core chips (v7x); on 1-TC chips keep
    # the cheaper single step.
    ncores = _num_tensorcores()
    if ncores > 1 and steps < ncores and rows >= 8 * ncores:
        tile = max(8, ((pl.cdiv(rows, ncores) + 7) // 8) * 8)
        steps = pl.cdiv(rows, tile)

    out = pl.pallas_call(
        _make_kernel(P),
        out_shape=jax.ShapeDtypeStruct((rows, cout), jnp.float32),
        grid=(steps,),
        in_specs=[
            pl.BlockSpec((tile, cin), lambda i: (i, 0)),             # feature rows
            pl.BlockSpec((w.shape[0], cout), lambda i: (0, 0)),      # resident weight
            pl.BlockSpec((1, cout), lambda i: (0, 0)),               # resident bias
            pl.BlockSpec((tile, keep2.shape[1]), lambda i: (i, 0)),  # narrow keep rows
            pl.BlockSpec(e.shape, lambda i: (0, 0)),                 # resident keep expander
        ],
        out_specs=pl.BlockSpec((tile, cout), lambda i: (i, 0)),
        compiler_params=pltpu.CompilerParams(
            dimension_semantics=("parallel",)),
    )(x2, w, b, keep2, e)

    # Free reshape: (rows, P*H) and (B, N, H) are the same bytes row-major.
    return out.reshape(B, N, H)


def _reference(keypoints_xyc, feats_masks, drop_kps, weight, bias, use_conf=True):
    B, N = feats_masks.shape
    feats = keypoints_xyc if use_conf else keypoints_xyc[..., :2]
    x = feats.reshape(B, N, -1).astype(jnp.float32)
    y = jnp.einsum("bnk,hk->bnh", x, jnp.asarray(weight, jnp.float32)) + bias
    keep = feats_masks[..., None] & (drop_kps != 1.0)
    return jnp.where(keep, y, 0.0).astype(jnp.float32)


if __name__ == "__main__":
    key = jax.random.PRNGKey(0)
    k1, k2, k3, k4, k5 = jax.random.split(key, 5)

    hidden_dim = 32
    use_conf = True
    in_features = 17 * 2 + (17 if use_conf else 0)      # 51

    weight = (jax.random.normal(k1, (hidden_dim, in_features), jnp.float32)
              * (1.0 / jnp.sqrt(in_features)))
    bias = jax.random.normal(k2, (hidden_dim,), jnp.float32) * 0.01
    prepped = prepare_kpts_linproj_params(weight, bias)   # prepared once, reused

    # --- small case (B=2, N=8): unpacked path, single grid step.
    B, N = 2, 8
    keypoints_xyc = jax.random.uniform(k3, (B, N, 17, 3), jnp.float32)
    feats_masks = jax.random.bernoulli(k4, 0.75, (B, N))
    drop_kps = jax.random.bernoulli(k5, 0.2, (B, N, 1)).astype(jnp.float32)

    tokens = jax.block_until_ready(
        keypoints_lin_proj(keypoints_xyc, feats_masks, drop_kps, weight, bias,
                           use_conf=use_conf, prepared=prepped))
    ref = _reference(keypoints_xyc, feats_masks, drop_kps, weight, bias, use_conf)
    assert tokens.shape == (B, N, hidden_dim)
    assert jnp.allclose(tokens, ref, atol=1e-5, rtol=1e-5)

    # --- packed path with a partial tail block (M=320 -> 80 packed rows, tile=32).
    kk = jax.random.split(jax.random.PRNGKey(1), 3)
    B2, N2 = 5, 64
    kp2 = jax.random.uniform(kk[0], (B2, N2, 17, 3), jnp.float32)
    fm2 = jax.random.bernoulli(kk[1], 0.6, (B2, N2))
    dk2 = jax.random.bernoulli(kk[2], 0.3, (B2, N2, 1)).astype(jnp.float32)
    tok2 = jax.block_until_ready(
        keypoints_lin_proj(kp2, fm2, dk2, weight, bias, use_conf=use_conf,
                           tm_tokens=128, prepared=prepped))
    ref2 = _reference(kp2, fm2, dk2, weight, bias, use_conf)
    assert tok2.shape == (B2, N2, hidden_dim)
    assert jnp.allclose(tok2, ref2, atol=1e-4, rtol=1e-4)

    # --- M not divisible by the packing factor: unpacked fallback + partial tail.
    kk = jax.random.split(jax.random.PRNGKey(2), 3)
    B3, N3 = 7, 93                                       # M = 651
    kp3 = jax.random.uniform(kk[0], (B3, N3, 17, 3), jnp.float32)
    fm3 = jax.random.bernoulli(kk[1], 0.6, (B3, N3))
    dk3 = jax.random.bernoulli(kk[2], 0.3, (B3, N3, 1)).astype(jnp.float32)
    tok3 = jax.block_until_ready(
        keypoints_lin_proj(kp3, fm3, dk3, weight, bias, use_conf=use_conf,
                           tm_tokens=256, prepared=prepped))
    ref3 = _reference(kp3, fm3, dk3, weight, bias, use_conf)
    assert tok3.shape == (B3, N3, hidden_dim)
    assert jnp.allclose(tok3, ref3, atol=1e-4, rtol=1e-4)

    # --- use_conf=False (in_features=34), packed path in a single full block.
    w34 = (jax.random.normal(jax.random.PRNGKey(3), (hidden_dim, 34), jnp.float32)
           * (1.0 / jnp.sqrt(34.0)))
    b34 = jax.random.normal(jax.random.PRNGKey(4), (hidden_dim,), jnp.float32) * 0.01
    kk = jax.random.split(jax.random.PRNGKey(5), 3)
    B4, N4 = 3, 16                                       # M = 48 -> 12 packed rows
    kp4 = jax.random.uniform(kk[0], (B4, N4, 17, 3), jnp.float32)
    fm4 = jax.random.bernoulli(kk[1], 0.7, (B4, N4))
    dk4 = jax.random.bernoulli(kk[2], 0.2, (B4, N4, 1)).astype(jnp.float32)
    tok4 = jax.block_until_ready(
        keypoints_lin_proj(kp4, fm4, dk4, w34, b34, use_conf=False))
    ref4 = _reference(kp4, fm4, dk4, w34, b34, use_conf=False)
    assert tok4.shape == (B4, N4, hidden_dim)
    assert jnp.allclose(tok4, ref4, atol=1e-5, rtol=1e-5)

    print("KERNEL_OK")
</pallas_src>

<mosaic_0001>
module attributes {stable_mosaic.version = 11 : i64} {
  func.func @kernel(%arg0: i32, %arg1: memref<16x51xf32, #tpu.memory_space<vmem>>, %arg2: memref<51x32xf32, #tpu.memory_space<vmem>>, %arg3: memref<1x32xf32, #tpu.memory_space<vmem>>, %arg4: memref<16x1xf32, #tpu.memory_space<vmem>>, %arg5: memref<1x32xf32, #tpu.memory_space<vmem>>, %arg6: memref<16x32xf32, #tpu.memory_space<vmem>>) attributes {dimension_semantics = [#tpu.dimension_semantics<parallel>], iteration_bounds = array<i64: 1>, scalar_prefetch = 0 : i64, scratch_operands = 0 : i64, tpu.core_type = #tpu.core_type<tc>, window_params = [{transform_indices = @transform_0, window_bounds = array<i64: 16, 51>}, {pipeline_mode = #tpu.pipeline_mode<synchronous>, transform_indices = @transform_1, window_bounds = array<i64: 51, 32>}, {pipeline_mode = #tpu.pipeline_mode<synchronous>, transform_indices = @transform_2, window_bounds = array<i64: 1, 32>}, {transform_indices = @transform_3, window_bounds = array<i64: 16, 1>}, {pipeline_mode = #tpu.pipeline_mode<synchronous>, transform_indices = @transform_4, window_bounds = array<i64: 1, 32>}, {transform_indices = @transform_5, window_bounds = array<i64: 16, 32>}]} {
    %c0 = arith.constant 0 : index
    %c0_0 = arith.constant 0 : index
    %0 = vector.load %arg1[%c0, %c0_0] : memref<16x51xf32, #tpu.memory_space<vmem>>, vector<16x51xf32>
    %c0_1 = arith.constant 0 : index
    %c0_2 = arith.constant 0 : index
    %1 = vector.load %arg2[%c0_1, %c0_2] : memref<51x32xf32, #tpu.memory_space<vmem>>, vector<51x32xf32>
    %cst = arith.constant dense<0.000000e+00> : vector<16x32xf32>
    %2 = tpu.matmul %0, %1, %cst {dimension_numbers = #tpu.dot_dimension_numbers<[1], [0], [0], [1], [0, 0, 1, 1], [], []>} : vector<16x51xf32>, vector<51x32xf32>, vector<16x32xf32> -> vector<16x32xf32>
    %c0_3 = arith.constant 0 : index
    %c0_4 = arith.constant 0 : index
    %3 = vector.load %arg4[%c0_3, %c0_4] : memref<16x1xf32, #tpu.memory_space<vmem>>, vector<16x1xf32>
    %c0_5 = arith.constant 0 : index
    %c0_6 = arith.constant 0 : index
    %4 = vector.load %arg3[%c0_5, %c0_6] : memref<1x32xf32, #tpu.memory_space<vmem>>, vector<1x32xf32>
    %5 = vector.broadcast %4 : vector<1x32xf32> to vector<16x32xf32>
    %6 = arith.addf %2, %5 : vector<16x32xf32>
    %7 = vector.broadcast %3 : vector<16x1xf32> to vector<16x32xf32>
    %8 = arith.mulf %6, %7 : vector<16x32xf32>
    %c0_7 = arith.constant 0 : index
    %c0_8 = arith.constant 0 : index
    %9 = vector.load %arg6[%c0_7, %c0_8] : memref<16x32xf32, #tpu.memory_space<vmem>>, vector<16x32xf32>
    tpu.vector_store %arg6[%c0_7, %c0_8], %8 {strides = array<i32>} : memref<16x32xf32, #tpu.memory_space<vmem>>, vector<16x32xf32>,
    return
  }
  func.func @transform_0(%arg0: i32) -> (i32, i32) {
    %c0_i32 = arith.constant 0 : i32
    %c0_i32_0 = arith.constant 0 : i32
    return %arg0, %c0_i32 : i32, i32
  }
  func.func @transform_1(%arg0: i32) -> (i32, i32) {
    %c0_i32 = arith.constant 0 : i32
    %c0_i32_0 = arith.constant 0 : i32
    %c0_i32_1 = arith.constant 0 : i32
    return %c0_i32, %c0_i32_0 : i32, i32
  }
  func.func @transform_2(%arg0: i32) -> (i32, i32) {
    %c0_i32 = arith.constant 0 : i32
    %c0_i32_0 = arith.constant 0 : i32
    %c0_i32_1 = arith.constant 0 : i32
    return %c0_i32, %c0_i32_0 : i32, i32
  }
  func.func @transform_3(%arg0: i32) -> (i32, i32) {
    %c0_i32 = arith.constant 0 : i32
    %c0_i32_0 = arith.constant 0 : i32
    return %arg0, %c0_i32 : i32, i32
  }
  func.func @transform_4(%arg0: i32) -> (i32, i32) {
    %c0_i32 = arith.constant 0 : i32
    %c0_i32_0 = arith.constant 0 : i32
    %c0_i32_1 = arith.constant 0 : i32
    return %c0_i32, %c0_i32_0 : i32, i32
  }
  func.func @transform_5(%arg0: i32) -> (i32, i32) {
    %c0_i32 = arith.constant 0 : i32
    %c0_i32_0 = arith.constant 0 : i32
    return %arg0, %c0_i32 : i32, i32
  }
}

</mosaic_0001>

<llo_original>
// kernel: tpu_custom_call.1
$region0: #{tpu_custom_call.1}
  #allocation0 [shape = 'u32[]', space=smem, size = 0x4, offset = 0x4, fixed_abs, tag = 'smem constant byte address 0x4 - core index']
  #allocation1 [shape = 'u32[144,128]{1,0:T(1,128)}', space=vmem, size = 0x12000, scoped, tag = 'internal scratch']
  %s0 = inlined_call_operand.vmem [shape: f32[16,51], index: 0, kind: input, shape index: {}]
  %s1 = inlined_call_operand.vmem [shape: f32[51,32], index: 1, kind: input, shape index: {}]
  %s2 = inlined_call_operand.vmem [shape: f32[1,32], index: 2, kind: input, shape index: {}]
  %s3 = inlined_call_operand.vmem [shape: f32[16,1], index: 3, kind: input, shape index: {}]
  %s4 = inlined_call_operand.vmem [shape: f32[1,32], index: 4, kind: input, shape index: {}]
  %s5 = inlined_call_operand.hbm [shape: f32[16,32], index: 5, kind: output, shape index: {}]
  %s6 = sld [smem:[#allocation0]]
  $region30: #{tpu_custom_call.1} parent=0
    _
  %s8 = ssub.s32 1, %s6
  %s9 = scalar_select 0, %s8, %s6
  $region1: #{tpu_custom_call.1} parent=0
    #allocation2 [shape = 'u8[8192]{0}', space=vmem, size = 0x2000, scoped, tag = 'output window, operand 0, single buffered']
    #allocation3 [shape = 's32[1]{0}', space=sflag, size = 0x4, scoped, tag = 'scoped memory for tpu_custom_call.1']
    %10 = vsyncpa [#allocation3], 0
    // Predicated region
    $region2: #{tpu_custom_call.1} parent=1 // pred_check
      _
    $region3: #{tpu_custom_call.1} parent=1 // pred_check_branch
      %12 = sbr.rel (0) target = $region5
    $region4: #{tpu_custom_call.1} parent=1 // pred_region
      _
    $region5: #{tpu_custom_call.1} parent=1 // pred_fallthru
      _
    // Predicated region
    $region6: #{tpu_custom_call.1} parent=1 // pred_check
      _
    $region7: #{tpu_custom_call.1} parent=1 // pred_check_branch
      %14 = sbr.rel (0) target = $region9
    $region8: #{tpu_custom_call.1} parent=1 // pred_region
      _
    $region9: #{tpu_custom_call.1} parent=1 // pred_fallthru
      _
    // Predicated region
    $region10: #{tpu_custom_call.1} parent=1 // pred_check
      _
    $region11: #{tpu_custom_call.1} parent=1 // pred_check_branch
      %16 = sbr.rel (0) target = $region13
    $region12: #{tpu_custom_call.1} parent=1 // pred_region
      _
    $region13: #{tpu_custom_call.1} parent=1 // pred_fallthru
      _
    // Predicated region
    $region14: #{tpu_custom_call.1} parent=1 // pred_check
      _
    $region15: #{tpu_custom_call.1} parent=1 // pred_check_branch
      %18 = sbr.rel (0) target = $region17
    $region16: #{tpu_custom_call.1} parent=1 // pred_region
      _
    $region17: #{tpu_custom_call.1} parent=1 // pred_fallthru
      _
    // Predicated region
    $region18: #{tpu_custom_call.1} parent=1 // pred_check
      _
    $region19: #{tpu_custom_call.1} parent=1 // pred_check_branch
      %20 = sbr.rel (0) target = $region21
    $region20: #{tpu_custom_call.1} parent=1 // pred_region
      _
    $region21: #{tpu_custom_call.1} parent=1 // pred_fallthru
      _
    %v21 = vld [vmem:[%s0] sm:$0xff]
    %v22 = vld [vmem:[%s0 + $0x8] sm:$0xff]
    %v23 = vld [vmem:[%s1] sm:$0xff]
    %v24 = vld [vmem:[%s1 + $0x8] sm:$0xff]
    %v25 = vld [vmem:[%s1 + $0x10] sm:$0xff]
    %v26 = vld [vmem:[%s1 + $0x18] sm:$0xff]
    %v27 = vld [vmem:[%s1 + $0x20] sm:$0xff]
    %v28 = vld [vmem:[%s1 + $0x28] sm:$0xff]
    %v29 = vld [vmem:[%s1 + $0x30] sm:$0x7]
    %v30 = vld [vmem:[%s3] sm:$0xff]
    %v31 = vld [vmem:[%s3 + $0x8] sm:$0xff]
    %v32 = vld [vmem:[%s2] sm:$0x1]
    %v34 = vlaneseq
    %v35 = vshrl.u32 %v34, 7
    %v36 = vsub.s32 0, %v35
    %v37 = vrot.slane %v32, %v36
    %vm39 = vcmask 416768
    %v41 = vsel %vm39, %v21, 0
    %v44 = vsel %vm39, %v22, 0
    %vm46 = vcmask 1042432
    %v48 = vsel %vm46, %v29, 0
    %50 = vmatprep.subr.mxu0 0.0
    %51 = vmatpush1.msra.mxu0 %v23
    %52 = vmatprep.subr.mxu0 0.0
    %53 = vmatpush1.msra.mxu0 %v24
    %54 = vmatprep.subr.mxu0 0.0
    %55 = vmatpush1.msra.mxu0 %v25
    %56 = vmatprep.subr.mxu0 0.0
    %57 = vmatpush1.msra.mxu0 %v26
    %58 = vmatprep.subr.mxu0 0.0
    %59 = vmatpush1.msra.mxu0 %v27
    %60 = vmatprep.subr.mxu0 0.0
    %61 = vmatpush1.msra.mxu0 %v28
    %62 = vmatprep.subr.mxu0 0.0
    %63 = vmatpush1.msra.mxu0 %v48
    %64 = vmatprep.subr.mxu0 0.0
    %65 = vmatpush1.msra.mxu0 0.0
    %66 = vmatprep.subr.mxu0 0.0
    %67 = vmatpush1.msra.mxu0 0.0
    %68 = vmatprep.subr.mxu0 0.0
    %69 = vmatpush1.msra.mxu0 0.0
    %70 = vmatprep.subr.mxu0 0.0
    %71 = vmatpush1.msra.mxu0 0.0
    %72 = vmatprep.subr.mxu0 0.0
    %73 = vmatpush1.msra.mxu0 0.0
    %74 = vmatprep.subr.mxu0 0.0
    %75 = vmatpush1.msra.mxu0 0.0
    %76 = vmatprep.subr.mxu0 0.0
    %77 = vmatpush1.msra.mxu0 0.0
    %78 = vmatprep.subr.mxu0 0.0
    %79 = vmatpush1.msra.mxu0 0.0
    %80 = vmatprep.subr.mxu0 0.0
    %81 = vmatpush1.msra.mxu0 0.0
    %82 = vmatprep.subr.mxu0 0.0
    %83 = vmatpush1.msra.mxu0 0.0
    %84 = vmatprep.subr.mxu0 0.0
    %85 = vmatpush1.msra.mxu0 0.0
    %86 = vmatprep.subr.mxu0 0.0
    %87 = vmatpush1.msra.mxu0 0.0
    %88 = vmatprep.subr.mxu0 0.0
    %89 = vmatpush1.msra.mxu0 0.0
    %90 = vmatprep.subr.mxu0 0.0
    %91 = vmatpush1.msra.mxu0 0.0
    %92 = vmatprep.subr.mxu0 0.0
    %93 = vmatpush1.msra.mxu0 0.0
    %94 = vmatprep.subr.mxu0 0.0
    %95 = vmatpush1.msra.mxu0 0.0
    %96 = vmatprep.subr.mxu0 0.0
    %97 = vmatpush1.msra.mxu0 0.0
    %98 = vmatprep.subr.mxu0 0.0
    %99 = vmatpush1.msra.mxu0 0.0
    %100 = vmatprep.subr.mxu0 0.0
    %101 = vmatpush1.msra.mxu0 0.0
    %102 = vmatprep.subr.mxu0 0.0
    %103 = vmatpush1.msra.mxu0 0.0
    %104 = vmatprep.subr.mxu0 0.0
    %105 = vmatpush1.msra.mxu0 0.0
    %106 = vmatprep.subr.mxu0 0.0
    %107 = vmatpush1.msra.mxu0 0.0
    %108 = vmatprep.subr.mxu0 0.0
    %109 = vmatpush1.msra.mxu0 0.0
    %110 = vmatprep.subr.mxu0 0.0
    %111 = vmatpush1.msra.mxu0 0.0
    %112 = vmatprep.subr.mxu0 0.0
    %113 = vmatpush1.msra.mxu0 0.0
    %114 = vmatprep.mubr.f32.mxu0 0.0
    %115 = vmatmul.mubr.f32.gmra.mrb[0].mxu0 %v41
    %v116 = vpop.f32.mrb[0].mxu0
    %v117 = vadd.f32 %v37, %v116
    %v118 = vpop.f32.mrb[0].mxu0
    %119 = vmatprep.mubr.f32.mxu0 0.0
    %120 = vmatmul.mubr.f32.gmra.mrb[0].mxu0 %v44
    %v121 = vpop.f32.mrb[0].mxu0
    %v122 = vadd.f32 %v37, %v121
    %v123 = vpop.f32.mrb[0].mxu0
    %124 = vdwg.mxu0
    %126 = vset.pattern.permute.xlu0 0
    %127 = vperm.xlu0 %126, %v30
    %v128 = vpop.permute.xlu0 %127
    %131 = vset.pattern.permute.xlu0 0
    %132 = vperm.xlu0 %131, %v31
    %v133 = vpop.permute.xlu0 %132
    %v135 = vmul.f32 %v117, %v128
    %v136 = vmul.f32 %v122, %v133
    %vm137 = vcmask 261120
    %138 = vst.msk [vmem:[#allocation2] sm:$0xff] %vm137, %v135
    %139 = vst.msk [vmem:[#allocation2 + $0x8] sm:$0xff] %vm137, %v136
    // Predicated region
    $region22: #{tpu_custom_call.1} parent=1 // pred_check
      _
    $region23: #{tpu_custom_call.1} parent=1 // pred_check_branch
      %141 = sbr.rel (0) target = $region25
    $region24: #{tpu_custom_call.1} parent=1 // pred_region
      %s143 = ssub.s32 256, 256
      %144 = vsyncadd [#allocation3], %s143
      %s145 = sshll.u32 [#allocation2], 4
      %s146 = int_to_ptr.vmem [resolvable:$true] %s145
      %151 = dma.vmem_to_hbm [thread:$0]  %s146, 256, %s5, [#allocation3], 128, 128, 8
    $region25: #{tpu_custom_call.1} parent=1 // pred_fallthru
      _
    // Predicated region
    $region26: #{tpu_custom_call.1} parent=1 // pred_check
      _
    $region27: #{tpu_custom_call.1} parent=1 // pred_check_branch
      %153 = sbr.rel (0) target = $region29
    $region28: #{tpu_custom_call.1} parent=1 // pred_region
      %154 = dma.done [#allocation3], 256
    $region29: #{tpu_custom_call.1} parent=1 // pred_fallthru
      _
    %155 = vsyncpa [#allocation3], 1

</llo_original>
